<compile_context>
chip_gen: v5e
topology: v5e:2x2
jax: 0.10.0
libtpu: 0.0.40
codegen_flags: <defaults>
</compile_context>

<pallas_src>
import functools

import jax
import jax.numpy as jnp
from jax.experimental import pallas as pl
from jax.experimental.pallas import tpu as pltpu

# "A @ B.T" contraction (contract the last dim of both operands) — the standard
# MXU path (same dimension numbers as q@k.T in flash attention).
_NT_DIMS = (((1,), (1,)), ((), ()))


def _mlp_critic_kernel(x_ref, w1_ref, b1_ref, w2_ref, b2_ref, w3_ref, b3_ref,
                       o_ref):
    f32 = jnp.float32

    # Layer 1 (single contraction, concat done outside), feature-major result:
    #   h1[h, t] = sum_d W1[h, d] * x[t, d] + b1[h]
    h1 = jax.lax.dot_general(w1_ref[...], x_ref[...], _NT_DIMS,
                             preferred_element_type=f32) + b1_ref[...]  # [H, TB]
    h1 = jnp.maximum(h1, 0.0)                       # ReLU in f32 (VPU)

    # Layer 2: standard MXU matmul; result stays feature-major / lane-dense.
    # (Only the activation is cast to the matmul dtype — weights arrive pre-cast.)
    h2 = jnp.dot(w2_ref[...], h1.astype(w2_ref.dtype),
                 preferred_element_type=f32) + b2_ref[...]              # [H, TB]
    h2 = jnp.maximum(h2, 0.0)

    # Layer 3 (H -> 1): VPU multiply + XLU sublane reduction, b3 scalar from SMEM.
    q = jnp.sum(h2 * w3_ref[...], axis=0, keepdims=True) + b3_ref[0, 0]  # [1, TB]
    o_ref[...] = q.astype(o_ref.dtype)


def _round_up(x, m):
    return ((x + m - 1) // m) * m


def _detect_num_tensorcores():
    """Best-effort TensorCore count per chip (2 on v7x, else 1)."""
    try:
        kind = jax.devices()[0].device_kind.lower()
        if "v7" in kind:
            return 2
    except Exception:
        pass
    return 1


def mlp_critic_forward(obs, acs, params, *, compute_dtype=jnp.bfloat16,
                       batch_tile=1024, num_cores=None, return_col=True):
    """Q1(obs, acs).  Params use PyTorch [out, in] layout (W1 un-split [H, d_in]).

    compute_dtype: MXU operand dtype (bf16 default; f32 accumulation always).
    return_col:    True -> [B, 1] (module convention; costs a small relayout),
                   False -> lane-dense [B] row (preferred for fused consumers).
    """
    w1, b1, w2, b2, w3, b3 = params
    B = obs.shape[0]
    d_in = obs.shape[1] + acs.shape[1]
    H = w2.shape[0]

    # All casts happen out here (no per-grid-step weight casts inside the kernel).
    # Concat + cast is one tiny wrapper-side XLA fusion; the kernel then does a
    # single layer-1 MXU pass instead of two fully K-padded ones.
    x = jnp.concatenate([obs.astype(compute_dtype), acs.astype(compute_dtype)],
                        axis=-1)                                  # [B, d_in]
    w1c = w1.astype(compute_dtype)                                # [H, d_in]
    w2c = w2.astype(compute_dtype)                                # [H, H]
    b1c = b1.astype(jnp.float32)                                  # [H, 1]
    b2c = b2.astype(jnp.float32)                                  # [H, 1]
    w3c = w3.astype(jnp.float32)                                  # [H, 1]
    b3c = jnp.asarray(b3, jnp.float32).reshape(1, 1)              # SMEM scalar

    if num_cores is None:
        num_cores = _detect_num_tensorcores()

    # Generation-aware batch tile:
    #  * v7x (2 TCs): make the "parallel" grid have >= 2 steps so both cores work.
    #  * v5e/v6e (1 TC): whole-batch single step for small B (no per-step overhead).
    if num_cores > 1 and B > 128:
        tb = min(batch_tile, _round_up(pl.cdiv(B, num_cores), 128))
    elif B <= batch_tile:
        tb = B
    else:
        tb = batch_tile
    grid = (pl.cdiv(B, tb),)

    # Explicit scoped-VMEM budget (double-buffered x/out tiles, resident weights,
    # f32 intermediates + bf16 copy of h1), with 2x headroom, clamped to 64 MiB
    # (v7x physical) and at least the 16 MiB v5e default.
    isz = jnp.dtype(compute_dtype).itemsize
    vmem_est = (2 * tb * d_in * isz            # x tile (double-buffered)
                + 2 * tb * 4                   # out tile (double-buffered)
                + (H * d_in + H * H) * isz     # W1, W2 (resident)
                + 3 * H * 4                    # b1, b2, w3
                + 2 * H * tb * 4               # h1, h2 (f32)
                + H * tb * isz)                # h1 cast for layer-2 matmul
    vmem_limit = int(min(64 << 20, max(16 << 20, 2 * vmem_est)))

    full = lambda shape: pl.BlockSpec(shape, lambda i: tuple(0 for _ in shape))

    q_row = pl.pallas_call(
        _mlp_critic_kernel,
        out_shape=jax.ShapeDtypeStruct((1, B), jnp.float32),
        grid=grid,
        in_specs=[
            pl.BlockSpec((tb, d_in), lambda i: (i, 0)),         # x (batch-tiled)
            full((H, d_in)),                                    # W1  [out, in]
            full((H, 1)),                                       # b1 (column)
            full((H, H)),                                       # W2  [out, in]
            full((H, 1)),                                       # b2 (column)
            full((H, 1)),                                       # W3^T (column)
            pl.BlockSpec(memory_space=pltpu.MemorySpace.SMEM),  # b3 scalar
        ],
        out_specs=pl.BlockSpec((1, tb), lambda i: (0, i)),      # lane-dense [1, B]
        compiler_params=pltpu.CompilerParams(
            dimension_semantics=("parallel",),
            vmem_limit_bytes=vmem_limit),
    )(x, w1c, b1c, w2c, b2c, w3c, b3c)

    if return_col:
        # Module convention [B, 1]; this moves B lanes -> sublanes (a real, if
        # tiny, relayout).  Pass return_col=False to keep the lane-dense row.
        return q_row.reshape(B, 1)
    return q_row[0]


def init_params(key, ob_dim, ac_dim, size, *, matmul_dtype=jnp.bfloat16):
    """nn.Linear-style init U(-1/sqrt(fan_in), 1/sqrt(fan_in)), PyTorch
    [out_features, in_features] layout.  Matmul weights (W1, W2) are stored in
    `matmul_dtype` (bf16 default) so the kernel never casts weights; biases and
    the H->1 projection stay f32 (they ride the f32 VPU/XLU path)."""
    d_in = ob_dim + ac_dim
    ks = jax.random.split(key, 6)

    def lin(kw, kb, fan_in, fan_out):
        bound = 1.0 / jnp.sqrt(jnp.float32(fan_in))
        w = jax.random.uniform(kw, (fan_out, fan_in), jnp.float32, -bound, bound)
        b = jax.random.uniform(kb, (fan_out, 1), jnp.float32, -bound, bound)
        return w, b

    w1, b1 = lin(ks[0], ks[1], d_in, size)      # [H, d_in], [H, 1]
    w2, b2 = lin(ks[2], ks[3], size, size)      # [H, H],    [H, 1]
    w3, b3 = lin(ks[4], ks[5], size, 1)         # [1, H],    [1, 1]
    return (w1.astype(matmul_dtype), b1,
            w2.astype(matmul_dtype), b2,
            w3.T, b3)                           # W3 stored as [H, 1] column


def reference_forward(obs, acs, params):
    """Pure-JAX f32 reference matching the PyTorch module semantics
    (uses the stored weight values, upcast to f32)."""
    w1, b1, w2, b2, w3, b3 = params
    x = jnp.concatenate([obs, acs], axis=-1).astype(jnp.float32)   # [B, d_in]
    h1 = jnp.maximum(x @ w1.astype(jnp.float32).T + b1[:, 0], 0.0)
    h2 = jnp.maximum(h1 @ w2.astype(jnp.float32).T + b2[:, 0], 0.0)
    return h2 @ w3.astype(jnp.float32) + b3[0, 0]                  # [B, 1]


if __name__ == "__main__":
    # Small test shapes consistent with forward(obs [B,ob_dim], acs [B,ac_dim]).
    B, OB_DIM, AC_DIM, HIDDEN = 8, 12, 4, 32
    # NOTE: the module's default size=256 is MXU-friendly; HIDDEN=32 only for test.

    key = jax.random.PRNGKey(0)
    k_obs, k_acs, k_params = jax.random.split(key, 3)
    obs = jax.random.normal(k_obs, (B, OB_DIM), jnp.float32)
    acs = jax.random.normal(k_acs, (B, AC_DIM), jnp.float32)
    params = init_params(k_params, OB_DIM, AC_DIM, HIDDEN)

    q1_ref = reference_forward(obs, acs, params)

    # Default path: bf16 MXU operands, f32 accumulation / bias / ReLU.
    q1 = jax.block_until_ready(mlp_critic_forward(obs, acs, params))
    assert q1.shape == (B, 1)
    assert jnp.allclose(q1, q1_ref, atol=5e-2, rtol=5e-2)

    # f32 compute path (same stored weight values -> tight tolerance).
    q1_f32 = jax.block_until_ready(
        mlp_critic_forward(obs, acs, params, compute_dtype=jnp.float32))
    assert q1_f32.shape == (B, 1)
    assert jnp.allclose(q1_f32, q1_ref, atol=1e-4, rtol=1e-4)

    # Lane-dense row output (no [B,1] relayout) for fused consumers.
    q1_row = jax.block_until_ready(
        mlp_critic_forward(obs, acs, params, return_col=False))
    assert q1_row.shape == (B,)
    assert jnp.allclose(q1_row, q1_ref[:, 0], atol=5e-2, rtol=5e-2)

    print("KERNEL_OK")
</pallas_src>

<mosaic_0001>
module attributes {stable_mosaic.version = 11 : i64} {
  func.func @_mlp_critic_kernel(%arg0: i32, %arg1: memref<8x16xbf16, #tpu.memory_space<vmem>>, %arg2: memref<32x16xbf16, #tpu.memory_space<vmem>>, %arg3: memref<32x1xf32, #tpu.memory_space<vmem>>, %arg4: memref<32x32xbf16, #tpu.memory_space<vmem>>, %arg5: memref<32x1xf32, #tpu.memory_space<vmem>>, %arg6: memref<32x1xf32, #tpu.memory_space<vmem>>, %arg7: memref<1x1xf32, #tpu.memory_space<smem>>, %arg8: memref<1x8xf32, #tpu.memory_space<vmem>>) attributes {dimension_semantics = [#tpu.dimension_semantics<parallel>], iteration_bounds = array<i64: 1>, scalar_prefetch = 0 : i64, scratch_operands = 0 : i64, tpu.core_type = #tpu.core_type<tc>, window_params = [{transform_indices = @transform_0, window_bounds = array<i64: 8, 16>}, {pipeline_mode = #tpu.pipeline_mode<synchronous>, transform_indices = @transform_1, window_bounds = array<i64: 32, 16>}, {pipeline_mode = #tpu.pipeline_mode<synchronous>, transform_indices = @transform_2, window_bounds = array<i64: 32, 1>}, {pipeline_mode = #tpu.pipeline_mode<synchronous>, transform_indices = @transform_3, window_bounds = array<i64: 32, 32>}, {pipeline_mode = #tpu.pipeline_mode<synchronous>, transform_indices = @transform_4, window_bounds = array<i64: 32, 1>}, {pipeline_mode = #tpu.pipeline_mode<synchronous>, transform_indices = @transform_5, window_bounds = array<i64: 32, 1>}, {transform_indices = @transform_6, window_bounds = array<i64: 1, 1>}, {transform_indices = @transform_7, window_bounds = array<i64: 1, 8>}]} {
    %c0 = arith.constant 0 : index
    %c0_0 = arith.constant 0 : index
    %0 = vector.load %arg2[%c0, %c0_0] : memref<32x16xbf16, #tpu.memory_space<vmem>>, vector<32x16xbf16>
    %c0_1 = arith.constant 0 : index
    %c0_2 = arith.constant 0 : index
    %1 = vector.load %arg1[%c0_1, %c0_2] : memref<8x16xbf16, #tpu.memory_space<vmem>>, vector<8x16xbf16>
    %cst = arith.constant dense<0.000000e+00> : vector<32x8xf32>
    %2 = tpu.matmul %0, %1, %cst {dimension_numbers = #tpu.dot_dimension_numbers<[1], [1], [0], [0], [0, 0, 1, 0], [], []>} : vector<32x16xbf16>, vector<8x16xbf16>, vector<32x8xf32> -> vector<32x8xf32>
    %c0_3 = arith.constant 0 : index
    %c0_4 = arith.constant 0 : index
    %3 = vector.load %arg3[%c0_3, %c0_4] : memref<32x1xf32, #tpu.memory_space<vmem>>, vector<32x1xf32>
    %4 = vector.broadcast %3 : vector<32x1xf32> to vector<32x8xf32>
    %5 = arith.addf %2, %4 : vector<32x8xf32>
    %cst_5 = arith.constant 0.000000e+00 : f32
    %6 = vector.broadcast %cst_5 : f32 to vector<32x8xf32>
    %7 = arith.maximumf %5, %6 : vector<32x8xf32>
    %c0_6 = arith.constant 0 : index
    %c0_7 = arith.constant 0 : index
    %8 = vector.load %arg4[%c0_6, %c0_7] : memref<32x32xbf16, #tpu.memory_space<vmem>>, vector<32x32xbf16>
    %9 = arith.truncf %7 : vector<32x8xf32> to vector<32x8xbf16>
    %cst_8 = arith.constant dense<0.000000e+00> : vector<32x8xf32>
    %10 = tpu.matmul %8, %9, %cst_8 {dimension_numbers = #tpu.dot_dimension_numbers<[1], [0], [0], [1], [0, 0, 1, 1], [], []>} : vector<32x32xbf16>, vector<32x8xbf16>, vector<32x8xf32> -> vector<32x8xf32>
    %c0_9 = arith.constant 0 : index
    %c0_10 = arith.constant 0 : index
    %11 = vector.load %arg5[%c0_9, %c0_10] : memref<32x1xf32, #tpu.memory_space<vmem>>, vector<32x1xf32>
    %12 = vector.broadcast %11 : vector<32x1xf32> to vector<32x8xf32>
    %13 = arith.addf %10, %12 : vector<32x8xf32>
    %cst_11 = arith.constant 0.000000e+00 : f32
    %14 = vector.broadcast %cst_11 : f32 to vector<32x8xf32>
    %15 = arith.maximumf %13, %14 : vector<32x8xf32>
    %c0_12 = arith.constant 0 : index
    %c0_13 = arith.constant 0 : index
    %16 = vector.load %arg6[%c0_12, %c0_13] : memref<32x1xf32, #tpu.memory_space<vmem>>, vector<32x1xf32>
    %17 = vector.broadcast %16 : vector<32x1xf32> to vector<32x8xf32>
    %18 = arith.mulf %15, %17 : vector<32x8xf32>
    %cst_14 = arith.constant dense<0.000000e+00> : vector<8xf32>
    %19 = vector.multi_reduction <add>, %18, %cst_14 [0] : vector<32x8xf32> to vector<8xf32>
    %20 = vector.shape_cast %19 : vector<8xf32> to vector<1x8xf32>
    %c0_15 = arith.constant 0 : index
    %c0_16 = arith.constant 0 : index
    %21 = memref.load %arg7[%c0_15, %c0_16] : memref<1x1xf32, #tpu.memory_space<smem>>
    %22 = vector.broadcast %21 : f32 to vector<1x8xf32>
    %23 = arith.addf %20, %22 : vector<1x8xf32>
    %c0_17 = arith.constant 0 : index
    %c0_18 = arith.constant 0 : index
    %24 = vector.load %arg8[%c0_17, %c0_18] : memref<1x8xf32, #tpu.memory_space<vmem>>, vector<1x8xf32>
    tpu.vector_store %arg8[%c0_17, %c0_18], %23 {strides = array<i32>} : memref<1x8xf32, #tpu.memory_space<vmem>>, vector<1x8xf32>,
    return
  }
  func.func @transform_0(%arg0: i32) -> (i32, i32) {
    %c0_i32 = arith.constant 0 : i32
    %c0_i32_0 = arith.constant 0 : i32
    return %arg0, %c0_i32 : i32, i32
  }
  func.func @transform_1(%arg0: i32) -> (i32, i32) {
    %c0_i32 = arith.constant 0 : i32
    %c0_i32_0 = arith.constant 0 : i32
    %c0_i32_1 = arith.constant 0 : i32
    return %c0_i32, %c0_i32_0 : i32, i32
  }
  func.func @transform_2(%arg0: i32) -> (i32, i32) {
    %c0_i32 = arith.constant 0 : i32
    %c0_i32_0 = arith.constant 0 : i32
    %c0_i32_1 = arith.constant 0 : i32
    return %c0_i32, %c0_i32_0 : i32, i32
  }
  func.func @transform_3(%arg0: i32) -> (i32, i32) {
    %c0_i32 = arith.constant 0 : i32
    %c0_i32_0 = arith.constant 0 : i32
    %c0_i32_1 = arith.constant 0 : i32
    return %c0_i32, %c0_i32_0 : i32, i32
  }
  func.func @transform_4(%arg0: i32) -> (i32, i32) {
    %c0_i32 = arith.constant 0 : i32
    %c0_i32_0 = arith.constant 0 : i32
    %c0_i32_1 = arith.constant 0 : i32
    return %c0_i32, %c0_i32_0 : i32, i32
  }
  func.func @transform_5(%arg0: i32) -> (i32, i32) {
    %c0_i32 = arith.constant 0 : i32
    %c0_i32_0 = arith.constant 0 : i32
    %c0_i32_1 = arith.constant 0 : i32
    return %c0_i32, %c0_i32_0 : i32, i32
  }
  func.func @transform_6(%arg0: i32) -> (i32, i32) {
    %c0_i32 = arith.constant 0 : i32
    %c0_i32_0 = arith.constant 0 : i32
    %c0_i32_1 = arith.constant 0 : i32
    return %c0_i32, %c0_i32_0 : i32, i32
  }
  func.func @transform_7(%arg0: i32) -> (i32, i32) {
    %c0_i32 = arith.constant 0 : i32
    %c0_i32_0 = arith.constant 0 : i32
    return %c0_i32, %arg0 : i32, i32
  }
}

</mosaic_0001>

<llo_original>
// kernel: tpu_custom_call.1
$region0: #{tpu_custom_call.1}
  #allocation0 [shape = 'u32[]', space=smem, size = 0x4, offset = 0x4, fixed_abs, tag = 'smem constant byte address 0x4 - core index']
  #allocation1 [shape = 'u32[72,128]{1,0:T(1,128)}', space=vmem, size = 0x9000, scoped, tag = 'internal scratch']
  #allocation2 [shape = 'f32[1,1]{1,0:T(1,128)S(6)}', space=smem, size = 0x200, scoped, tag = 'scoped memory for tpu_custom_call.1']
  %s0 = inlined_call_operand.vmem [shape: bf16[8,16], index: 0, kind: input, shape index: {}]
  %s1 = inlined_call_operand.vmem [shape: bf16[32,16], index: 1, kind: input, shape index: {}]
  %s2 = inlined_call_operand.vmem [shape: f32[32,1], index: 2, kind: input, shape index: {}]
  %s3 = inlined_call_operand.vmem [shape: bf16[32,32], index: 3, kind: input, shape index: {}]
  %s4 = inlined_call_operand.vmem [shape: f32[32,1], index: 4, kind: input, shape index: {}]
  %s5 = inlined_call_operand.vmem [shape: f32[32,1], index: 5, kind: input, shape index: {}]
  %s6 = inlined_call_operand.<no memory space> [shape: f32[1,1], index: 6, kind: input, shape index: {}]
  %s7 = inlined_call_operand.hbm [shape: f32[1,8], index: 7, kind: output, shape index: {}]
  %s8 = sld [smem:[#allocation0]]
  $region38: #{tpu_custom_call.1} parent=0
    _
  %s10 = ssub.s32 1, %s8
  %s11 = scalar_select 0, %s10, %s8
  %12 = sst [smem:[#allocation2]] %s6
  $region1: #{tpu_custom_call.1} parent=0
    #allocation3 [shape = 'u8[512]{0}', space=vmem, size = 0x400, scoped, tag = 'output window, operand 0, single buffered']
    #allocation4 [shape = 's32[1]{0}', space=sflag, size = 0x4, scoped, tag = 'scoped memory for tpu_custom_call.1']
    %13 = vsyncpa [#allocation4], 0
    // Predicated region
    $region2: #{tpu_custom_call.1} parent=1 // pred_check
      _
    $region3: #{tpu_custom_call.1} parent=1 // pred_check_branch
      %15 = sbr.rel (0) target = $region5
    $region4: #{tpu_custom_call.1} parent=1 // pred_region
      _
    $region5: #{tpu_custom_call.1} parent=1 // pred_fallthru
      _
    // Predicated region
    $region6: #{tpu_custom_call.1} parent=1 // pred_check
      _
    $region7: #{tpu_custom_call.1} parent=1 // pred_check_branch
      %17 = sbr.rel (0) target = $region9
    $region8: #{tpu_custom_call.1} parent=1 // pred_region
      _
    $region9: #{tpu_custom_call.1} parent=1 // pred_fallthru
      _
    // Predicated region
    $region10: #{tpu_custom_call.1} parent=1 // pred_check
      _
    $region11: #{tpu_custom_call.1} parent=1 // pred_check_branch
      %19 = sbr.rel (0) target = $region13
    $region12: #{tpu_custom_call.1} parent=1 // pred_region
      _
    $region13: #{tpu_custom_call.1} parent=1 // pred_fallthru
      _
    // Predicated region
    $region14: #{tpu_custom_call.1} parent=1 // pred_check
      _
    $region15: #{tpu_custom_call.1} parent=1 // pred_check_branch
      %21 = sbr.rel (0) target = $region17
    $region16: #{tpu_custom_call.1} parent=1 // pred_region
      _
    $region17: #{tpu_custom_call.1} parent=1 // pred_fallthru
      _
    // Predicated region
    $region18: #{tpu_custom_call.1} parent=1 // pred_check
      _
    $region19: #{tpu_custom_call.1} parent=1 // pred_check_branch
      %23 = sbr.rel (0) target = $region21
    $region20: #{tpu_custom_call.1} parent=1 // pred_region
      _
    $region21: #{tpu_custom_call.1} parent=1 // pred_fallthru
      _
    // Predicated region
    $region22: #{tpu_custom_call.1} parent=1 // pred_check
      _
    $region23: #{tpu_custom_call.1} parent=1 // pred_check_branch
      %25 = sbr.rel (0) target = $region25
    $region24: #{tpu_custom_call.1} parent=1 // pred_region
      _
    $region25: #{tpu_custom_call.1} parent=1 // pred_fallthru
      _
    // Predicated region
    $region26: #{tpu_custom_call.1} parent=1 // pred_check
      _
    $region27: #{tpu_custom_call.1} parent=1 // pred_check_branch
      %27 = sbr.rel (0) target = $region29
    $region28: #{tpu_custom_call.1} parent=1 // pred_region
      _
    $region29: #{tpu_custom_call.1} parent=1 // pred_fallthru
      _
    %v29 = vld [vmem:[%s1] sm:$0xf]
    %v30 = vld [vmem:[%s1 + $0x4] sm:$0xf]
    %v31 = vld [vmem:[%s1 + $0x8] sm:$0xf]
    %v32 = vld [vmem:[%s1 + $0xc] sm:$0xf]
    %v33 = vld [vmem:[%s0] sm:$0xf]
    %v34 = vld [vmem:[%s2] sm:$0xff]
    %v35 = vld [vmem:[%s2 + $0x8] sm:$0xff]
    %v36 = vld [vmem:[%s2 + $0x10] sm:$0xff]
    %v37 = vld [vmem:[%s2 + $0x18] sm:$0xff]
    %39 = vset.pattern.permute.xlu0 0
    %40 = vperm.xlu0 %39, %v34
    %v41 = vpop.permute.xlu0 %40
    %44 = vset.pattern.permute.xlu0 0
    %45 = vperm.xlu0 %44, %v35
    %v46 = vpop.permute.xlu0 %45
    %49 = vset.pattern.permute.xlu0 0
    %50 = vperm.xlu0 %49, %v36
    %v51 = vpop.permute.xlu0 %50
    %54 = vset.pattern.permute.xlu0 0
    %55 = vperm.xlu0 %54, %v37
    %v56 = vpop.permute.xlu0 %55
    %v62 = vunpack.c.l.b16 %v29
    %v63 = vunpack.c.l.b16 %v30
    %v64 = vunpack.c.l.b16 %v31
    %v65 = vunpack.c.l.b16 %v32
    %v66 = vpack.c.b16 %v63, %v62
    %v67 = vpack.c.b16 %v65, %v64
    %vm68 = vcmask 130048
    %v70 = vsel %vm68, %v66, 0
    %v73 = vsel %vm68, %v67, 0
    %v76 = vsel %vm68, %v33, 0
    %78 = vmatpush.bf16.xpose.msra.mxu0 0
    %79 = vmatpush.bf16.xpose.msra.mxu0 0
    %80 = vmatpush.bf16.xpose.msra.mxu0 0
    %81 = vmatpush.bf16.xpose.msra.mxu0 0
    %82 = vmatpush.bf16.xpose.msra.mxu0 0
    %83 = vmatpush.bf16.xpose.msra.mxu0 0
    %84 = vmatpush.bf16.xpose.msra.mxu0 0
    %85 = vmatpush.bf16.xpose.msra.mxu0 %v76
    %86 = vmatmul.bf16.gmra.mxu0 %v70
    %v87 = vpop.f32.mrf.mxu0
    %v88 = vadd.f32 %v41, %v87
    %v89 = vpop.f32.mrf.mxu0
    %v90 = vadd.f32 %v46, %v89
    %91 = vmatmul.bf16.gmra.mxu0 %v73
    %v92 = vpop.f32.mrf.mxu0
    %v93 = vadd.f32 %v51, %v92
    %v94 = vpop.f32.mrf.mxu0
    %v95 = vadd.f32 %v56, %v94
    %96 = vdwg.mxu0
    %v97 = vmax.f32 %v88, 0.0
    %v98 = vmax.f32 %v90, 0.0
    %v99 = vmax.f32 %v93, 0.0
    %v100 = vmax.f32 %v95, 0.0
    %v101 = vld [vmem:[%s3] sm:$0xf]
    %v102 = vld [vmem:[%s3 + $0x4] sm:$0xf]
    %v103 = vld [vmem:[%s3 + $0x8] sm:$0xf]
    %v104 = vld [vmem:[%s3 + $0xc] sm:$0xf]
    %v105 = vpack.c.bf16 %v98, %v97
    %v106 = vpack.c.bf16 %v100, %v99
    %v107 = vld [vmem:[%s4] sm:$0xff]
    %v108 = vld [vmem:[%s4 + $0x8] sm:$0xff]
    %v109 = vld [vmem:[%s4 + $0x10] sm:$0xff]
    %v110 = vld [vmem:[%s4 + $0x18] sm:$0xff]
    %112 = vset.pattern.permute.xlu0 0
    %113 = vperm.xlu0 %112, %v107
    %v114 = vpop.permute.xlu0 %113
    %117 = vset.pattern.permute.xlu0 0
    %118 = vperm.xlu0 %117, %v108
    %v119 = vpop.permute.xlu0 %118
    %122 = vset.pattern.permute.xlu0 0
    %123 = vperm.xlu0 %122, %v109
    %v124 = vpop.permute.xlu0 %123
    %127 = vset.pattern.permute.xlu0 0
    %128 = vperm.xlu0 %127, %v110
    %v129 = vpop.permute.xlu0 %128
    %v135 = vunpack.c.l.b16 %v101
    %v136 = vunpack.c.l.b16 %v102
    %v137 = vunpack.c.l.b16 %v103
    %v138 = vunpack.c.l.b16 %v104
    %v139 = vpack.c.b16 %v136, %v135
    %v140 = vpack.c.b16 %v138, %v137
    %vm141 = vcmask 261120
    %v143 = vsel %vm141, %v139, 0
    %v146 = vsel %vm141, %v140, 0
    %148 = vmatpush.bf16.msra.mxu0 0
    %149 = vmatpush.bf16.msra.mxu0 0
    %150 = vmatpush.bf16.msra.mxu0 0
    %151 = vmatpush.bf16.msra.mxu0 0
    %152 = vmatpush.bf16.msra.mxu0 0
    %153 = vmatpush.bf16.msra.mxu0 0
    %154 = vmatpush.bf16.msra.mxu0 %v106
    %155 = vmatpush.bf16.msra.mxu0 %v105
    %156 = vmatmul.bf16.gmra.mxu0 %v143
    %v157 = vpop.f32.mrf.mxu0
    %v158 = vadd.f32 %v114, %v157
    %v159 = vpop.f32.mrf.mxu0
    %v160 = vadd.f32 %v119, %v159
    %161 = vmatmul.bf16.gmra.mxu0 %v146
    %v162 = vpop.f32.mrf.mxu0
    %v163 = vadd.f32 %v124, %v162
    %v164 = vpop.f32.mrf.mxu0
    %v165 = vadd.f32 %v129, %v164
    %166 = vdwg.mxu0
    %v167 = vmax.f32 %v158, 0.0
    %v168 = vmax.f32 %v160, 0.0
    %v169 = vmax.f32 %v163, 0.0
    %v170 = vmax.f32 %v165, 0.0
    %v171 = vld [vmem:[%s5] sm:$0xff]
    %v172 = vld [vmem:[%s5 + $0x8] sm:$0xff]
    %v173 = vld [vmem:[%s5 + $0x10] sm:$0xff]
    %v174 = vld [vmem:[%s5 + $0x18] sm:$0xff]
    %176 = vset.pattern.permute.xlu0 0
    %177 = vperm.xlu0 %176, %v171
    %v178 = vpop.permute.xlu0 %177
    %181 = vset.pattern.permute.xlu0 0
    %182 = vperm.xlu0 %181, %v172
    %v183 = vpop.permute.xlu0 %182
    %186 = vset.pattern.permute.xlu0 0
    %187 = vperm.xlu0 %186, %v173
    %v188 = vpop.permute.xlu0 %187
    %191 = vset.pattern.permute.xlu0 0
    %192 = vperm.xlu0 %191, %v174
    %v193 = vpop.permute.xlu0 %192
    %v195 = vmul.f32 %v167, %v178
    %v196 = vmul.f32 %v168, %v183
    %v197 = vmul.f32 %v169, %v188
    %v198 = vmul.f32 %v170, %v193
    %vm199 = vcmask 64512
    %v200 = vsel %vm199, %v195, 0.0
    %v201 = vsel %vm199, %v196, 0.0
    %v202 = vadd.f32 %v200, %v201
    %v203 = vsel %vm199, %v197, 0.0
    %v204 = vadd.f32 %v202, %v203
    %v205 = vsel %vm199, %v198, 0.0
    %v206 = vadd.f32 %v204, %v205
    %v207 = vrot.slane %v206, 4
    %v208 = vadd.f32 %v206, %v207
    %v209 = vrot.slane %v208, 2
    %v210 = vadd.f32 %v208, %v209
    %v211 = vrot.slane %v210, 1
    %v212 = vadd.f32 %v210, %v211
    %s213 = sld [smem:[#allocation2]]
    %v214 = vstv %s213
    %v215 = vadd.f32 %v212, %v214
    %vm216 = vcmask 57344
    %217 = vst.msk [vmem:[#allocation3] sm:$0x1] %vm216, %v215
    // Predicated region
    $region30: #{tpu_custom_call.1} parent=1 // pred_check
      _
    $region31: #{tpu_custom_call.1} parent=1 // pred_check_branch
      %219 = sbr.rel (0) target = $region33
    $region32: #{tpu_custom_call.1} parent=1 // pred_region
      %221 = vsyncadd [#allocation4], 0
      %s223 = sshll.u32 [#allocation3], 4
      %s224 = int_to_ptr.vmem [resolvable:$true] %s223
      %s225 = sshll.u32 %s7, 4
      %s226 = int_to_ptr.hbm [resolvable:$true] %s225
      %228 = dma.vmem_to_hbm [thread:$0]  %s224, 16, %s226, [#allocation4]
    $region33: #{tpu_custom_call.1} parent=1 // pred_fallthru
      _
    // Predicated region
    $region34: #{tpu_custom_call.1} parent=1 // pred_check
      _
    $region35: #{tpu_custom_call.1} parent=1 // pred_check_branch
      %230 = sbr.rel (0) target = $region37
    $region36: #{tpu_custom_call.1} parent=1 // pred_region
      %232 = dma.done [#allocation4], 16
    $region37: #{tpu_custom_call.1} parent=1 // pred_fallthru
      _
    %233 = vsyncpa [#allocation4], 1

</llo_original>
